<compile_context>
chip_gen: v5e
topology: v5e:2x2
jax: 0.10.0
libtpu: 0.0.40
codegen_flags: <defaults>
</compile_context>

<pallas_src>
import functools

import jax
import jax.numpy as jnp
from jax.experimental import pallas as pl
from jax.experimental.pallas import tpu as pltpu


def layernorm_kernel(x_ref, a_ref, b_ref, o_ref, *, eps, inv_nm1):
    # x_ref: (tm, D) rows of the flattened input
    # a_ref: (1, D)  gamma (a_2), resident
    # b_ref: (1, D)  beta  (b_2), resident
    # o_ref: (tm, D)
    x = x_ref[...].astype(jnp.float32)
    mean = jnp.mean(x, axis=-1, keepdims=True)
    xc = x - mean
    # torch.std() is unbiased by default -> divide by (D - 1); eps is added to std.
    var = jnp.sum(xc * xc, axis=-1, keepdims=True) * inv_nm1
    std = jnp.sqrt(var)
    y = a_ref[...].astype(jnp.float32) * xc / (std + eps) + b_ref[...].astype(jnp.float32)
    o_ref[...] = y.astype(o_ref.dtype)


def layernorm_pallas(x, a_2, b_2, *, eps=1e-6, tm=256):
    """x: (..., D). Returns LayerNorm(x) of the same shape."""
    D = x.shape[-1]
    lead = x.shape[:-1]
    x_flat = x.reshape(-1, D)
    M = x_flat.shape[0]

    # --- pick a row tile --------------------------------------------------
    # Multiple of 8 (sublane); don't over-pad tiny inputs; cap so the
    # double-buffered input + output tiles stay well inside scoped VMEM
    # (v7x has only 64 MiB/TC physical).
    bytes_per_row = D * x_flat.dtype.itemsize
    vmem_budget = 16 * 1024 * 1024
    max_tm_vmem = max(8, vmem_budget // (4 * max(bytes_per_row, 1)))
    tm = min(tm, max_tm_vmem, pl.cdiv(M, 8) * 8)
    tm = max(8, (tm // 8) * 8)

    # Ragged M: pad rows instead of asserting divisibility. Padded rows are all
    # zeros -> (x - mean) = 0, std = 0, division by eps is finite; sliced off below.
    M_pad = pl.cdiv(M, tm) * tm
    if M_pad != M:
        x_flat = jnp.pad(x_flat, ((0, M_pad - M), (0, 0)))

    a_2d = a_2.reshape(1, D)
    b_2d = b_2.reshape(1, D)

    kernel = functools.partial(
        layernorm_kernel, eps=float(eps), inv_nm1=1.0 / float(max(D - 1, 1))
    )

    out_flat = pl.pallas_call(
        kernel,
        out_shape=jax.ShapeDtypeStruct((M_pad, D), x.dtype),
        grid_spec=pltpu.PrefetchScalarGridSpec(
            num_scalar_prefetch=0,
            grid=(M_pad // tm,),
            in_specs=[
                pl.BlockSpec((tm, D), lambda i: (i, 0)),
                pl.BlockSpec((1, D), lambda i: (0, 0)),
                pl.BlockSpec((1, D), lambda i: (0, 0)),
            ],
            out_specs=pl.BlockSpec((tm, D), lambda i: (i, 0)),
        ),
        compiler_params=pltpu.CompilerParams(
            dimension_semantics=("parallel",),      # shards rows across TCs on v7x
            vmem_limit_bytes=64 * 1024 * 1024,      # allow large row tiles
        ),
    )(x_flat, a_2d, b_2d)

    if M_pad != M:
        out_flat = out_flat[:M]
    return out_flat.reshape(*lead, D)


if __name__ == "__main__":
    # Small shapes consistent with the module's forward: x is (batch, seq, hidden)
    batch, seq, hidden = 2, 8, 32
    eps = 1e-6

    key = jax.random.PRNGKey(0)
    kx, ka, kb = jax.random.split(key, 3)

    x = jax.random.normal(kx, (batch, seq, hidden), dtype=jnp.float32)
    # Module default init is ones/zeros; perturb so both params are exercised.
    a_2 = jnp.ones((hidden,), jnp.float32) + 0.1 * jax.random.normal(ka, (hidden,), jnp.float32)
    b_2 = 0.1 * jax.random.normal(kb, (hidden,), dtype=jnp.float32)

    out = layernorm_pallas(x, a_2, b_2, eps=eps)
    out = jax.block_until_ready(out)

    # Reference in plain JAX (same math as the PyTorch forward; torch.std is unbiased)
    mean = jnp.mean(x, axis=-1, keepdims=True)
    std = jnp.std(x, axis=-1, keepdims=True, ddof=1)
    ref = a_2 * (x - mean) / (std + eps) + b_2

    assert out.shape == (batch, seq, hidden)
    assert jnp.allclose(out, ref, atol=1e-5, rtol=1e-5), float(jnp.max(jnp.abs(out - ref)))

    print("KERNEL_OK")
</pallas_src>

<mosaic_0001>
module attributes {stable_mosaic.version = 11 : i64} {
  func.func @layernorm_kernel(%arg0: i32, %arg1: memref<16x32xf32, #tpu.memory_space<vmem>>, %arg2: memref<1x32xf32, #tpu.memory_space<vmem>>, %arg3: memref<1x32xf32, #tpu.memory_space<vmem>>, %arg4: memref<16x32xf32, #tpu.memory_space<vmem>>) attributes {dimension_semantics = [#tpu.dimension_semantics<parallel>], iteration_bounds = array<i64: 1>, scalar_prefetch = 0 : i64, scratch_operands = 0 : i64, tpu.core_type = #tpu.core_type<tc>, window_params = [{transform_indices = @transform_0, window_bounds = array<i64: 16, 32>}, {pipeline_mode = #tpu.pipeline_mode<synchronous>, transform_indices = @transform_1, window_bounds = array<i64: 1, 32>}, {pipeline_mode = #tpu.pipeline_mode<synchronous>, transform_indices = @transform_2, window_bounds = array<i64: 1, 32>}, {transform_indices = @transform_3, window_bounds = array<i64: 16, 32>}]} {
    %c0 = arith.constant 0 : index
    %c0_0 = arith.constant 0 : index
    %0 = vector.load %arg1[%c0, %c0_0] : memref<16x32xf32, #tpu.memory_space<vmem>>, vector<16x32xf32>
    %cst = arith.constant dense<0.000000e+00> : vector<16xf32>
    %1 = vector.multi_reduction <add>, %0, %cst [1] : vector<16x32xf32> to vector<16xf32>
    %2 = vector.shape_cast %1 : vector<16xf32> to vector<16x1xf32>
    %cst_1 = arith.constant 3.200000e+01 : f32
    %3 = vector.broadcast %cst_1 : f32 to vector<16x1xf32>
    %4 = arith.divf %2, %3 : vector<16x1xf32>
    %5 = vector.broadcast %4 : vector<16x1xf32> to vector<16x32xf32>
    %6 = arith.subf %0, %5 : vector<16x32xf32>
    %7 = arith.mulf %6, %6 : vector<16x32xf32>
    %cst_2 = arith.constant dense<0.000000e+00> : vector<16xf32>
    %8 = vector.multi_reduction <add>, %7, %cst_2 [1] : vector<16x32xf32> to vector<16xf32>
    %9 = vector.shape_cast %8 : vector<16xf32> to vector<16x1xf32>
    %cst_3 = arith.constant 0.0322580636 : f32
    %10 = vector.broadcast %cst_3 : f32 to vector<16x1xf32>
    %11 = arith.mulf %9, %10 : vector<16x1xf32>
    %12 = math.sqrt %11 : vector<16x1xf32>
    %c0_4 = arith.constant 0 : index
    %c0_5 = arith.constant 0 : index
    %13 = vector.load %arg2[%c0_4, %c0_5] : memref<1x32xf32, #tpu.memory_space<vmem>>, vector<1x32xf32>
    %14 = vector.broadcast %13 : vector<1x32xf32> to vector<16x32xf32>
    %15 = arith.mulf %14, %6 : vector<16x32xf32>
    %cst_6 = arith.constant 9.99999997E-7 : f32
    %16 = vector.broadcast %cst_6 : f32 to vector<16x1xf32>
    %17 = arith.addf %12, %16 : vector<16x1xf32>
    %18 = vector.broadcast %17 : vector<16x1xf32> to vector<16x32xf32>
    %19 = arith.divf %15, %18 : vector<16x32xf32>
    %c0_7 = arith.constant 0 : index
    %c0_8 = arith.constant 0 : index
    %20 = vector.load %arg3[%c0_7, %c0_8] : memref<1x32xf32, #tpu.memory_space<vmem>>, vector<1x32xf32>
    %21 = vector.broadcast %20 : vector<1x32xf32> to vector<16x32xf32>
    %22 = arith.addf %19, %21 : vector<16x32xf32>
    %c0_9 = arith.constant 0 : index
    %c0_10 = arith.constant 0 : index
    %23 = vector.load %arg4[%c0_9, %c0_10] : memref<16x32xf32, #tpu.memory_space<vmem>>, vector<16x32xf32>
    tpu.vector_store %arg4[%c0_9, %c0_10], %22 {strides = array<i32>} : memref<16x32xf32, #tpu.memory_space<vmem>>, vector<16x32xf32>,
    return
  }
  func.func @transform_0(%arg0: i32) -> (i32, i32) {
    %c0_i32 = arith.constant 0 : i32
    %c0_i32_0 = arith.constant 0 : i32
    return %arg0, %c0_i32 : i32, i32
  }
  func.func @transform_1(%arg0: i32) -> (i32, i32) {
    %c0_i32 = arith.constant 0 : i32
    %c0_i32_0 = arith.constant 0 : i32
    %c0_i32_1 = arith.constant 0 : i32
    return %c0_i32, %c0_i32_0 : i32, i32
  }
  func.func @transform_2(%arg0: i32) -> (i32, i32) {
    %c0_i32 = arith.constant 0 : i32
    %c0_i32_0 = arith.constant 0 : i32
    %c0_i32_1 = arith.constant 0 : i32
    return %c0_i32, %c0_i32_0 : i32, i32
  }
  func.func @transform_3(%arg0: i32) -> (i32, i32) {
    %c0_i32 = arith.constant 0 : i32
    %c0_i32_0 = arith.constant 0 : i32
    return %arg0, %c0_i32 : i32, i32
  }
}

</mosaic_0001>

<llo_original>
// kernel: tpu_custom_call.1
$region0: #{tpu_custom_call.1}
  #allocation0 [shape = 'u32[]', space=smem, size = 0x4, offset = 0x4, fixed_abs, tag = 'smem constant byte address 0x4 - core index']
  #allocation1 [shape = 'u32[72,128]{1,0:T(1,128)}', space=vmem, size = 0x9000, scoped, tag = 'internal scratch']
  %s0 = inlined_call_operand.hbm [shape: f32[16,32], index: 0, kind: input, shape index: {}]
  %s1 = inlined_call_operand.hbm [shape: f32[1,32], index: 1, kind: input, shape index: {}]
  %s2 = inlined_call_operand.vmem [shape: f32[1,32], index: 2, kind: input, shape index: {}]
  %s3 = inlined_call_operand.hbm [shape: f32[16,32], index: 3, kind: output, shape index: {}]
  %s4 = sld [smem:[#allocation0]]
  $region30: #{tpu_custom_call.1} parent=0
    _
  %s6 = ssub.s32 1, %s4
  %s7 = scalar_select 0, %s6, %s4
  $region1: #{tpu_custom_call.1} parent=0
    #allocation2 [shape = 'u8[8192]{0}', space=vmem, size = 0x2000, scoped, tag = 'input window, operand 0, single buffered']
    #allocation3 [shape = 's32[1]{0}', space=sflag, size = 0x4, scoped, tag = 'scoped memory for tpu_custom_call.1']
    #allocation4 [shape = 's32[1]{0}', space=sflag, size = 0x4, scoped, tag = 'scoped memory for tpu_custom_call.1']
    #allocation5 [shape = 'u8[512]{0}', space=vmem, size = 0x400, scoped, tag = 'input window, operand 1, single buffered']
    #allocation6 [shape = 's32[1]{0}', space=sflag, size = 0x4, scoped, tag = 'scoped memory for tpu_custom_call.1']
    #allocation7 [shape = 'u8[8192]{0}', space=vmem, size = 0x2000, scoped, tag = 'output window, operand 0, single buffered']
    %8 = vsyncpa [#allocation3], 0
    %9 = vsyncpa [#allocation6], 0
    %10 = vsyncpa [#allocation4], 0
    // Predicated region
    $region2: #{tpu_custom_call.1} parent=1 // pred_check
      _
    $region3: #{tpu_custom_call.1} parent=1 // pred_check_branch
      %12 = sbr.rel (0) target = $region5
    $region4: #{tpu_custom_call.1} parent=1 // pred_region
      %14 = vsyncadd [#allocation3], 0
      %s15 = sshll.u32 %s0, 4
      %s16 = int_to_ptr.hbm [resolvable:$true] %s15
      %s17 = sshll.u32 [#allocation2], 4
      %s18 = int_to_ptr.vmem [resolvable:$true] %s17
      %23 = dma.hbm_to_vmem [thread:$0]  %s16, 256, %s18, [#allocation3], 128, 128, 8
    $region5: #{tpu_custom_call.1} parent=1 // pred_fallthru
      _
    // Predicated region
    $region6: #{tpu_custom_call.1} parent=1 // pred_check
      _
    $region7: #{tpu_custom_call.1} parent=1 // pred_check_branch
      %25 = sbr.rel (0) target = $region9
    $region8: #{tpu_custom_call.1} parent=1 // pred_region
      %27 = vsyncadd [#allocation6], 0
      %s29 = sshll.u32 %s1, 4
      %s30 = int_to_ptr.hbm [resolvable:$true] %s29
      %s31 = sshll.u32 [#allocation5], 4
      %s32 = int_to_ptr.vmem [resolvable:$true] %s31
      %34 = dma.hbm_to_vmem [thread:$0]  %s30, 16, %s32, [#allocation6]
    $region9: #{tpu_custom_call.1} parent=1 // pred_fallthru
      _
    // Predicated region
    $region10: #{tpu_custom_call.1} parent=1 // pred_check
      _
    $region11: #{tpu_custom_call.1} parent=1 // pred_check_branch
      %36 = sbr.rel (0) target = $region13
    $region12: #{tpu_custom_call.1} parent=1 // pred_region
      _
    $region13: #{tpu_custom_call.1} parent=1 // pred_fallthru
      _
    // Predicated region
    $region14: #{tpu_custom_call.1} parent=1 // pred_check
      _
    $region15: #{tpu_custom_call.1} parent=1 // pred_check_branch
      %38 = sbr.rel (0) target = $region17
    $region16: #{tpu_custom_call.1} parent=1 // pred_region
      %40 = dma.done [#allocation3], 256
    $region17: #{tpu_custom_call.1} parent=1 // pred_fallthru
      _
    // Predicated region
    $region18: #{tpu_custom_call.1} parent=1 // pred_check
      _
    $region19: #{tpu_custom_call.1} parent=1 // pred_check_branch
      %42 = sbr.rel (0) target = $region21
    $region20: #{tpu_custom_call.1} parent=1 // pred_region
      %44 = dma.done [#allocation6], 16
    $region21: #{tpu_custom_call.1} parent=1 // pred_fallthru
      _
    %v45 = vld [vmem:[#allocation2] sm:$0xff]
    %v46 = vld [vmem:[#allocation2 + $0x8] sm:$0xff]
    %vm47 = vcmask 261120
    %v48 = vsel %vm47, %v45, 0.0
    %49 = vadd.xlane.f32.xlu0 %v48
    %v50 = vpop.xlane.xlu0 %49
    %v51 = vsel %vm47, %v46, 0.0
    %52 = vadd.xlane.f32.xlu0 %v51
    %v53 = vpop.xlane.xlu0 %52
    %v54 = vrcp.pop 32.0
    %v55 = vmul.f32 32.0, %v54
    %v56 = vsub.f32 1.0, %v55
    %v57 = vmul.f32 %v54, %v56
    %v58 = vadd.f32 %v54, %v57
    %vm59 = vweird.f32 %v54
    %v60 = vsel %vm59, %v54, %v58
    %v61 = vmul.f32 %v50, %v60
    %v62 = vmul.f32 %v53, %v60
    %v63 = vsub.f32 %v45, %v61
    %v64 = vsub.f32 %v46, %v62
    %v65 = vmul.f32 %v63, %v63
    %v66 = vmul.f32 %v64, %v64
    %v67 = vsel %vm47, %v65, 0.0
    %68 = vadd.xlane.f32.xlu0 %v67
    %v69 = vpop.xlane.xlu0 %68
    %v70 = vsel %vm47, %v66, 0.0
    %71 = vadd.xlane.f32.xlu0 %v70
    %v72 = vpop.xlane.xlu0 %71
    %v73 = vmul.f32 %v69, 0.032258064
    %v74 = vmul.f32 %v72, 0.032258064
    %v75 = vrsqrt.pop %v73
    %v76 = vmul.f32 %v75, %v73
    %v77 = vmul.f32 %v76, %v75
    %v78 = vmul.f32 0.5, %v77
    %v79 = vsub.f32 1.5, %v78
    %v80 = vmul.f32 %v75, %v79
    %v81 = vmul.f32 %v73, %v80
    %vm82 = vcmp.eq.f32.partialorder %v73, inf
    %v83 = vsel %vm82, %v73, %v81
    %vm84 = vcmp.eq.f32.partialorder %v73, 0.0
    %v85 = vand.u32 %v73, 2147483648
    %v86 = vsel %vm84, %v85, %v83
    %v87 = vrsqrt.pop %v74
    %v88 = vmul.f32 %v87, %v74
    %v89 = vmul.f32 %v88, %v87
    %v90 = vmul.f32 0.5, %v89
    %v91 = vsub.f32 1.5, %v90
    %v92 = vmul.f32 %v87, %v91
    %v93 = vmul.f32 %v74, %v92
    %vm94 = vcmp.eq.f32.partialorder %v74, inf
    %v95 = vsel %vm94, %v74, %v93
    %vm96 = vcmp.eq.f32.partialorder %v74, 0.0
    %v97 = vand.u32 %v74, 2147483648
    %v98 = vsel %vm96, %v97, %v95
    %v99 = vld [vmem:[#allocation5] sm:$0x1]
    %v101 = vperm.slane %v99, 0
    %v103 = vmul.f32 %v101, %v63
    %v104 = vmul.f32 %v101, %v64
    %v105 = vadd.f32 %v86, 1e-06
    %v106 = vadd.f32 %v98, 1e-06
    %v107 = vrcp.pop %v105
    %v108 = vmul.f32 %v105, %v107
    %v109 = vsub.f32 1.0, %v108
    %v110 = vmul.f32 %v107, %v109
    %v111 = vadd.f32 %v107, %v110
    %vm112 = vweird.f32 %v105
    %vm113 = vweird.f32 %v107
    %vm114 = vmor %vm112, %vm113
    %v115 = vsel %vm114, %v107, %v111
    %v116 = vand.u32 2147483647, %v105
    %vm117 = vcmp.eq.f32.partialorder %v116, 8.507059e+37
    %v118 = vand.u32 %v105, 2147483648
    %v119 = vor.u32 1.1754944e-38, %v118
    %v120 = vsel %vm117, %v119, %v115
    %v121 = vmul.f32 %v103, %v120
    %v122 = vrcp.pop %v106
    %v123 = vmul.f32 %v106, %v122
    %v124 = vsub.f32 1.0, %v123
    %v125 = vmul.f32 %v122, %v124
    %v126 = vadd.f32 %v122, %v125
    %vm127 = vweird.f32 %v106
    %vm128 = vweird.f32 %v122
    %vm129 = vmor %vm127, %vm128
    %v130 = vsel %vm129, %v122, %v126
    %v131 = vand.u32 2147483647, %v106
    %vm132 = vcmp.eq.f32.partialorder %v131, 8.507059e+37
    %v133 = vand.u32 %v106, 2147483648
    %v134 = vor.u32 1.1754944e-38, %v133
    %v135 = vsel %vm132, %v134, %v130
    %v136 = vmul.f32 %v104, %v135
    %v137 = vld [vmem:[%s2] sm:$0x1]
    %v139 = vperm.slane %v137, 0
    %v141 = vadd.f32 %v121, %v139
    %v142 = vadd.f32 %v136, %v139
    %143 = vst.msk [vmem:[#allocation7] sm:$0xff] %vm47, %v141
    %144 = vst.msk [vmem:[#allocation7 + $0x8] sm:$0xff] %vm47, %v142
    // Predicated region
    $region22: #{tpu_custom_call.1} parent=1 // pred_check
      _
    $region23: #{tpu_custom_call.1} parent=1 // pred_check_branch
      %146 = sbr.rel (0) target = $region25
    $region24: #{tpu_custom_call.1} parent=1 // pred_region
      %148 = vsyncadd [#allocation4], 0
      %s149 = sshll.u32 [#allocation7], 4
      %s150 = int_to_ptr.vmem [resolvable:$true] %s149
      %s151 = sshll.u32 %s3, 4
      %s152 = int_to_ptr.hbm [resolvable:$true] %s151
      %157 = dma.vmem_to_hbm [thread:$0]  %s150, 256, %s152, [#allocation4], 128, 128, 8
    $region25: #{tpu_custom_call.1} parent=1 // pred_fallthru
      _
    // Predicated region
    $region26: #{tpu_custom_call.1} parent=1 // pred_check
      _
    $region27: #{tpu_custom_call.1} parent=1 // pred_check_branch
      %159 = sbr.rel (0) target = $region29
    $region28: #{tpu_custom_call.1} parent=1 // pred_region
      %161 = dma.done [#allocation4], 256
    $region29: #{tpu_custom_call.1} parent=1 // pred_fallthru
      _
    %162 = vsyncpa [#allocation3], 1
    %163 = vsyncpa [#allocation6], 1
    %164 = vsyncpa [#allocation4], 1

</llo_original>
